<compile_context>
chip_gen: v7x
topology: tpu7x:2x2x1
jax: 0.10.0
libtpu: 0.0.40
codegen_flags: <defaults>
</compile_context>

<pallas_src>
import functools

import jax
import jax.numpy as jnp
from jax.experimental import pallas as pl
from jax.experimental.pallas import tpu as pltpu


def _wce_kernel(w_ref, x_ref, gt_ref, loss_ref, wsum_ref, *, num_classes):
    """One (batch, pixel-tile) grid step -> (8, 128) partial sums for that tile."""
    gt = gt_ref[0, 0]                                        # (ROWS, 128) int32
    # Per-class slices, cast to f32 per slice (keeps a bf16 HBM stream bf16 and
    # avoids materializing a full-tile f32 temp for the whole block).
    xs = [x_ref[0, c].astype(jnp.float32) for c in range(num_classes)]

    # Running max over classes -- unrolled, pure per-lane VPU work.
    m = xs[0]
    for c in range(1, num_classes):
        m = jnp.maximum(m, xs[c])

    sum_exp = jnp.zeros_like(m)
    x_gt = jnp.zeros_like(m)     # logit at the gt class
    w_gt = jnp.zeros_like(m)     # w[gt] (0 for out-of-range / padded labels)
    for c in range(num_classes):
        xc = xs[c]
        sum_exp = sum_exp + jnp.exp(xc - m)
        sel = gt == c
        x_gt = jnp.where(sel, xc, x_gt)
        w_gt = jnp.where(sel, w_ref[c], w_gt)                # scalar from SMEM

    # -log softmax(x)[gt] = m + log(sum_exp) - x[gt]
    nll = m + jnp.log(sum_exp) - x_gt
    loss = w_gt * nll

    # Tile-aligned (8, 128) partial sums: the reshape keeps (8,128) tiles intact
    # (free), and the reduction is pure cross-vreg VALU adds (no XLU).
    rows = loss.shape[0]
    loss_ref[...] = jnp.sum(loss.reshape(rows // 8, 8, 128), axis=0)[None, None]
    wsum_ref[...] = jnp.sum(w_gt.reshape(rows // 8, 8, 128), axis=0)[None, None]


def _choose_tile_rows(num_classes, logit_bytes, rows_needed, vmem_budget_bytes):
    # VMEM bytes per pixel: double-buffered logits + labels, plus headroom for the
    # (C + ~8) simultaneously-live f32 element-wise temporaries in the kernel.
    per_pix = (2 * num_classes * logit_bytes      # logits, double-buffered
               + 2 * 4                            # int32 labels, double-buffered
               + (num_classes + 8) * 4)           # f32 temps headroom
    max_pix = max(1024, vmem_budget_bytes // per_pix)
    tile_rows = max(8, (max_pix // 128 // 8) * 8)   # multiple of 8 sublanes
    return min(tile_rows, rows_needed)


def weight_ce_loss(pred, gt, w, *, tile_rows=None,
                   vmem_budget_bytes=20 * 1024 * 1024):
    """F.cross_entropy(pred, gt, weight=w) with 'mean' reduction.

    pred: (N, C, H, W) float logits, gt: (N, H, W) int labels, w: (C,) float.
    Returns sum_i w[gt_i] * nll_i / sum_i w[gt_i].
    """
    n, c, h, wd = pred.shape
    hw = h * wd

    rows_needed = pl.cdiv(hw, 128)
    rows_needed = ((rows_needed + 7) // 8) * 8
    if tile_rows is None:
        tile_rows = _choose_tile_rows(c, jnp.dtype(pred.dtype).itemsize,
                                      rows_needed, vmem_budget_bytes)
    tile_rows = max(8, (min(tile_rows, rows_needed) // 8) * 8)
    num_tiles = pl.cdiv(rows_needed, tile_rows)
    rows_padded = num_tiles * tile_rows
    hw_padded = rows_padded * 128

    # Contiguous views (free); pad only if needed so the hot loop is mask-free:
    # padded logits are 0 and padded labels are the out-of-range class `c`, so
    # padded pixels contribute 0 to both sums (and nll stays finite -> no NaN).
    x = pred.reshape(n, c, hw)
    g = gt.reshape(n, 1, hw).astype(jnp.int32)
    # TODO(synk): int16/int8 labels would cut label HBM traffic ~3/4; kept int32
    # to avoid sub-32-bit relayout cost in the compare->select path.
    if hw_padded != hw:
        # TODO(synk): for very large misaligned H*W, an in-kernel final-tile mask
        # would avoid this pad copy.
        x = jnp.pad(x, ((0, 0), (0, 0), (0, hw_padded - hw)))
        g = jnp.pad(g, ((0, 0), (0, 0), (0, hw_padded - hw)), constant_values=c)
    x = x.reshape(n, c, rows_padded, 128)
    g = g.reshape(n, 1, rows_padded, 128)
    wv = w.reshape(c).astype(jnp.float32)

    kernel = functools.partial(_wce_kernel, num_classes=c)

    loss_parts, w_parts = pl.pallas_call(
        kernel,
        out_shape=(
            jax.ShapeDtypeStruct((n, num_tiles, 8, 128), jnp.float32),
            jax.ShapeDtypeStruct((n, num_tiles, 8, 128), jnp.float32),
        ),
        grid_spec=pltpu.PrefetchScalarGridSpec(
            num_scalar_prefetch=0,
            grid=(n, num_tiles),
            in_specs=[
                pl.BlockSpec(memory_space=pltpu.MemorySpace.SMEM),        # w (C,)
                pl.BlockSpec((1, c, tile_rows, 128),
                             lambda ni, pj: (ni, 0, pj, 0)),              # logits
                pl.BlockSpec((1, 1, tile_rows, 128),
                             lambda ni, pj: (ni, 0, pj, 0)),              # labels
            ],
            out_specs=[
                pl.BlockSpec((1, 1, 8, 128), lambda ni, pj: (ni, pj, 0, 0)),
                pl.BlockSpec((1, 1, 8, 128), lambda ni, pj: (ni, pj, 0, 0)),
            ],
        ),
        compiler_params=pltpu.CompilerParams(
            dimension_semantics=("parallel", "parallel"),
            vmem_limit_bytes=32 * 1024 * 1024,
        ),
    )(wv, x, g)

    return jnp.sum(loss_parts) / jnp.sum(w_parts)


def _reference(pred, gt, w):
    logp = jax.nn.log_softmax(pred.astype(jnp.float32), axis=1)        # (N,C,H,W)
    nll = -jnp.take_along_axis(logp, gt[:, None, :, :], axis=1)[:, 0]  # (N,H,W)
    wg = w[gt]
    return jnp.sum(wg * nll) / jnp.sum(wg)


if __name__ == "__main__":
    key = jax.random.PRNGKey(0)
    k1, k2, k3 = jax.random.split(key, 3)

    # Primary check: shapes implied by the module's typical use.
    N, C, H, W = 2, 4, 16, 16
    pred = jax.random.normal(k1, (N, C, H, W), dtype=jnp.float32)
    gt = jax.random.randint(k2, (N, H, W), 0, C, dtype=jnp.int32)
    w = jax.random.uniform(k3, (C,), dtype=jnp.float32, minval=0.5, maxval=2.0)

    loss = jax.block_until_ready(weight_ce_loss(pred, gt, w))
    ref = _reference(pred, gt, w)
    assert jnp.allclose(loss, ref, rtol=1e-4, atol=1e-4), (loss, ref)

    # Secondary check: multiple pixel tiles + padded (non-divisible) H*W.
    H2, W2 = 36, 36   # HW = 1296 -> 16 rows padded; tile_rows=8 -> 2 tiles
    pred2 = jax.random.normal(k1, (N, C, H2, W2), dtype=jnp.float32)
    gt2 = jax.random.randint(k2, (N, H2, W2), 0, C, dtype=jnp.int32)

    loss2 = jax.block_until_ready(weight_ce_loss(pred2, gt2, w, tile_rows=8))
    ref2 = _reference(pred2, gt2, w)
    assert jnp.allclose(loss2, ref2, rtol=1e-4, atol=1e-4), (loss2, ref2)

    print("KERNEL_OK")
</pallas_src>

<mosaic_0001>
module attributes {stable_mosaic.version = 11 : i64} {
  func.func @_wce_kernel(%arg0: i32, %arg1: i32, %arg2: memref<4xf32, #tpu.memory_space<smem>>, %arg3: memref<1x4x8x128xf32, #tpu.memory_space<vmem>>, %arg4: memref<1x1x8x128xi32, #tpu.memory_space<vmem>>, %arg5: memref<1x1x8x128xf32, #tpu.memory_space<vmem>>, %arg6: memref<1x1x8x128xf32, #tpu.memory_space<vmem>>) attributes {dimension_semantics = [#tpu.dimension_semantics<parallel>, #tpu.dimension_semantics<parallel>], iteration_bounds = array<i64: 2, 1>, scalar_prefetch = 0 : i64, scratch_operands = 0 : i64, tpu.core_type = #tpu.core_type<tc>, window_params = [{transform_indices = @transform_0, window_bounds = array<i64: 4>}, {transform_indices = @transform_1, window_bounds = array<i64: 1, 4, 8, 128>}, {transform_indices = @transform_2, window_bounds = array<i64: 1, 1, 8, 128>}, {transform_indices = @transform_3, window_bounds = array<i64: 1, 1, 8, 128>}, {transform_indices = @transform_4, window_bounds = array<i64: 1, 1, 8, 128>}]} {
    %c0 = arith.constant 0 : index
    %c0_0 = arith.constant 0 : index
    %c0_1 = arith.constant 0 : index
    %c0_2 = arith.constant 0 : index
    %0 = vector.load %arg4[%c0, %c0_0, %c0_1, %c0_2] : memref<1x1x8x128xi32, #tpu.memory_space<vmem>>, vector<1x1x8x128xi32>
    %1 = vector.shape_cast %0 : vector<1x1x8x128xi32> to vector<8x128xi32>
    %c0_3 = arith.constant 0 : index
    %c0_4 = arith.constant 0 : index
    %c0_5 = arith.constant 0 : index
    %c0_6 = arith.constant 0 : index
    %2 = vector.load %arg3[%c0_3, %c0_4, %c0_5, %c0_6] : memref<1x4x8x128xf32, #tpu.memory_space<vmem>>, vector<1x1x8x128xf32>
    %3 = vector.shape_cast %2 : vector<1x1x8x128xf32> to vector<8x128xf32>
    %c0_7 = arith.constant 0 : index
    %c1 = arith.constant 1 : index
    %c0_8 = arith.constant 0 : index
    %c0_9 = arith.constant 0 : index
    %4 = vector.load %arg3[%c0_7, %c1, %c0_8, %c0_9] : memref<1x4x8x128xf32, #tpu.memory_space<vmem>>, vector<1x1x8x128xf32>
    %5 = vector.shape_cast %4 : vector<1x1x8x128xf32> to vector<8x128xf32>
    %c0_10 = arith.constant 0 : index
    %c2 = arith.constant 2 : index
    %c0_11 = arith.constant 0 : index
    %c0_12 = arith.constant 0 : index
    %6 = vector.load %arg3[%c0_10, %c2, %c0_11, %c0_12] : memref<1x4x8x128xf32, #tpu.memory_space<vmem>>, vector<1x1x8x128xf32>
    %7 = vector.shape_cast %6 : vector<1x1x8x128xf32> to vector<8x128xf32>
    %c0_13 = arith.constant 0 : index
    %c3 = arith.constant 3 : index
    %c0_14 = arith.constant 0 : index
    %c0_15 = arith.constant 0 : index
    %8 = vector.load %arg3[%c0_13, %c3, %c0_14, %c0_15] : memref<1x4x8x128xf32, #tpu.memory_space<vmem>>, vector<1x1x8x128xf32>
    %9 = vector.shape_cast %8 : vector<1x1x8x128xf32> to vector<8x128xf32>
    %10 = arith.maximumf %3, %5 : vector<8x128xf32>
    %11 = arith.maximumf %10, %7 : vector<8x128xf32>
    %12 = arith.maximumf %11, %9 : vector<8x128xf32>
    %cst = arith.constant 0.000000e+00 : f32
    %13 = vector.broadcast %cst : f32 to vector<8x128xf32>
    %cst_16 = arith.constant 0.000000e+00 : f32
    %14 = vector.broadcast %cst_16 : f32 to vector<8x128xf32>
    %cst_17 = arith.constant 0.000000e+00 : f32
    %15 = vector.broadcast %cst_17 : f32 to vector<8x128xf32>
    %16 = arith.subf %3, %12 : vector<8x128xf32>
    %17 = math.exp %16 : vector<8x128xf32>
    %18 = arith.addf %13, %17 : vector<8x128xf32>
    %c0_i32 = arith.constant 0 : i32
    %19 = vector.broadcast %c0_i32 : i32 to vector<8x128xi32>
    %20 = arith.cmpi eq, %1, %19 : vector<8x128xi32>
    %21 = arith.select %20, %3, %14 : vector<8x128xi1>, vector<8x128xf32>
    %c0_18 = arith.constant 0 : index
    %22 = memref.load %arg2[%c0_18] : memref<4xf32, #tpu.memory_space<smem>>
    %23 = vector.broadcast %22 : f32 to vector<8x128xf32>
    %24 = arith.select %20, %23, %15 : vector<8x128xi1>, vector<8x128xf32>
    %25 = arith.subf %5, %12 : vector<8x128xf32>
    %26 = math.exp %25 : vector<8x128xf32>
    %27 = arith.addf %18, %26 : vector<8x128xf32>
    %c1_i32 = arith.constant 1 : i32
    %28 = vector.broadcast %c1_i32 : i32 to vector<8x128xi32>
    %29 = arith.cmpi eq, %1, %28 : vector<8x128xi32>
    %30 = arith.select %29, %5, %21 : vector<8x128xi1>, vector<8x128xf32>
    %c1_19 = arith.constant 1 : index
    %31 = memref.load %arg2[%c1_19] : memref<4xf32, #tpu.memory_space<smem>>
    %32 = vector.broadcast %31 : f32 to vector<8x128xf32>
    %33 = arith.select %29, %32, %24 : vector<8x128xi1>, vector<8x128xf32>
    %34 = arith.subf %7, %12 : vector<8x128xf32>
    %35 = math.exp %34 : vector<8x128xf32>
    %36 = arith.addf %27, %35 : vector<8x128xf32>
    %c2_i32 = arith.constant 2 : i32
    %37 = vector.broadcast %c2_i32 : i32 to vector<8x128xi32>
    %38 = arith.cmpi eq, %1, %37 : vector<8x128xi32>
    %39 = arith.select %38, %7, %30 : vector<8x128xi1>, vector<8x128xf32>
    %c2_20 = arith.constant 2 : index
    %40 = memref.load %arg2[%c2_20] : memref<4xf32, #tpu.memory_space<smem>>
    %41 = vector.broadcast %40 : f32 to vector<8x128xf32>
    %42 = arith.select %38, %41, %33 : vector<8x128xi1>, vector<8x128xf32>
    %43 = arith.subf %9, %12 : vector<8x128xf32>
    %44 = math.exp %43 : vector<8x128xf32>
    %45 = arith.addf %36, %44 : vector<8x128xf32>
    %c3_i32 = arith.constant 3 : i32
    %46 = vector.broadcast %c3_i32 : i32 to vector<8x128xi32>
    %47 = arith.cmpi eq, %1, %46 : vector<8x128xi32>
    %48 = arith.select %47, %9, %39 : vector<8x128xi1>, vector<8x128xf32>
    %c3_21 = arith.constant 3 : index
    %49 = memref.load %arg2[%c3_21] : memref<4xf32, #tpu.memory_space<smem>>
    %50 = vector.broadcast %49 : f32 to vector<8x128xf32>
    %51 = arith.select %47, %50, %42 : vector<8x128xi1>, vector<8x128xf32>
    %52 = math.log %45 : vector<8x128xf32>
    %53 = arith.addf %12, %52 : vector<8x128xf32>
    %54 = arith.subf %53, %48 : vector<8x128xf32>
    %55 = arith.mulf %51, %54 : vector<8x128xf32>
    %56 = vector.shape_cast %55 : vector<8x128xf32> to vector<1x8x128xf32>
    %cst_22 = arith.constant dense<0.000000e+00> : vector<8x128xf32>
    %57 = vector.multi_reduction <add>, %56, %cst_22 [0] : vector<1x8x128xf32> to vector<8x128xf32>
    %58 = vector.shape_cast %57 : vector<8x128xf32> to vector<1x1x8x128xf32>
    %c0_23 = arith.constant 0 : index
    %c0_24 = arith.constant 0 : index
    %c0_25 = arith.constant 0 : index
    %c0_26 = arith.constant 0 : index
    %59 = vector.load %arg5[%c0_23, %c0_24, %c0_25, %c0_26] : memref<1x1x8x128xf32, #tpu.memory_space<vmem>>, vector<1x1x8x128xf32>
    tpu.vector_store %arg5[%c0_23, %c0_24, %c0_25, %c0_26], %58 {strides = array<i32>} : memref<1x1x8x128xf32, #tpu.memory_space<vmem>>, vector<1x1x8x128xf32>,
    %60 = vector.shape_cast %51 : vector<8x128xf32> to vector<1x8x128xf32>
    %cst_27 = arith.constant dense<0.000000e+00> : vector<8x128xf32>
    %61 = vector.multi_reduction <add>, %60, %cst_27 [0] : vector<1x8x128xf32> to vector<8x128xf32>
    %62 = vector.shape_cast %61 : vector<8x128xf32> to vector<1x1x8x128xf32>
    %c0_28 = arith.constant 0 : index
    %c0_29 = arith.constant 0 : index
    %c0_30 = arith.constant 0 : index
    %c0_31 = arith.constant 0 : index
    %63 = vector.load %arg6[%c0_28, %c0_29, %c0_30, %c0_31] : memref<1x1x8x128xf32, #tpu.memory_space<vmem>>, vector<1x1x8x128xf32>
    tpu.vector_store %arg6[%c0_28, %c0_29, %c0_30, %c0_31], %62 {strides = array<i32>} : memref<1x1x8x128xf32, #tpu.memory_space<vmem>>, vector<1x1x8x128xf32>,
    return
  }
  func.func @transform_0(%arg0: i32, %arg1: i32) -> i32 {
    %c0_i32 = arith.constant 0 : i32
    %c0_i32_0 = arith.constant 0 : i32
    return %c0_i32 : i32
  }
  func.func @transform_1(%arg0: i32, %arg1: i32) -> (i32, i32, i32, i32) {
    %c0_i32 = arith.constant 0 : i32
    %c0_i32_0 = arith.constant 0 : i32
    %c0_i32_1 = arith.constant 0 : i32
    return %arg0, %c0_i32, %arg1, %c0_i32_0 : i32, i32, i32, i32
  }
  func.func @transform_2(%arg0: i32, %arg1: i32) -> (i32, i32, i32, i32) {
    %c0_i32 = arith.constant 0 : i32
    %c0_i32_0 = arith.constant 0 : i32
    %c0_i32_1 = arith.constant 0 : i32
    return %arg0, %c0_i32, %arg1, %c0_i32_0 : i32, i32, i32, i32
  }
  func.func @transform_3(%arg0: i32, %arg1: i32) -> (i32, i32, i32, i32) {
    %c0_i32 = arith.constant 0 : i32
    %c0_i32_0 = arith.constant 0 : i32
    %c0_i32_1 = arith.constant 0 : i32
    return %arg0, %arg1, %c0_i32, %c0_i32_0 : i32, i32, i32, i32
  }
  func.func @transform_4(%arg0: i32, %arg1: i32) -> (i32, i32, i32, i32) {
    %c0_i32 = arith.constant 0 : i32
    %c0_i32_0 = arith.constant 0 : i32
    %c0_i32_1 = arith.constant 0 : i32
    return %arg0, %arg1, %c0_i32, %c0_i32_0 : i32, i32, i32, i32
  }
}

</mosaic_0001>

<llo_original>
// kernel: tpu_custom_call.1
$region0: #{tpu_custom_call.1}
  #allocation0 [shape = 'u32[]', space=smem, size = 0x4, offset = 0x4, fixed_abs, tag = 'smem constant byte address 0x4 - core index']
  #allocation1 [shape = 'u32[144,128]{1,0:T(1,128)}', space=vmem, size = 0x12000, scoped, tag = 'internal scratch']
  %s0 = inlined_call_operand.hbm [shape: f32[4], index: 0, kind: input, shape index: {}]
  %s1 = inlined_call_operand.hbm [shape: f32[2,4,8,128], index: 1, kind: input, shape index: {}]
  %s2 = inlined_call_operand.hbm [shape: s32[2,1,8,128], index: 2, kind: input, shape index: {}]
  %s3 = inlined_call_operand.hbm [shape: f32[2,1,8,128], index: 3, kind: output, shape index: {0}]
  %s4 = inlined_call_operand.hbm [shape: f32[2,1,8,128], index: 4, kind: output, shape index: {1}]
  %5 = xla_tuple %s3, %s4
  %s6 = sld [smem:[#allocation0]]
  $region65: #{tpu_custom_call.1} parent=0
    _
  %s8 = ssub.s32 1, %s6
  %s9 = scalar_select 0, %s8, %s6
  $region1: #{tpu_custom_call.1} parent=0
    #allocation2 [shape = 'u8[512]{0}', space=smem, size = 0x200, scoped, tag = 'input window, operand 0, single buffered']
    #allocation3 [shape = 's32[2]{0}', space=sflag, size = 0x8, scoped, tag = 'scoped memory for tpu_custom_call.1']
    #allocation4 [shape = 's32[2]{0}', space=sflag, size = 0x8, scoped, tag = 'scoped memory for tpu_custom_call.1']
    #allocation5 [shape = 's32[2]{0}', space=sflag, size = 0x8, scoped, tag = 'scoped memory for tpu_custom_call.1']
    #allocation6 [shape = 'u8[32768]{0}', space=vmem, size = 0x8000, scoped, tag = 'input window, operand 1']
    #allocation7 [shape = 'u8[8192]{0}', space=vmem, size = 0x2000, scoped, tag = 'input window, operand 2']
    #allocation8 [shape = 's32[2]{0}', space=sflag, size = 0x8, scoped, tag = 'scoped memory for tpu_custom_call.1']
    #allocation9 [shape = 'u8[8192]{0}', space=vmem, size = 0x2000, scoped, tag = 'output window, operand 0']
    #allocation10 [shape = 'u8[8192]{0}', space=vmem, size = 0x2000, scoped, tag = 'output window, operand 1']
    #allocation11 [shape = 's32[2]{0}', space=sflag, size = 0x8, scoped, tag = 'scoped memory for tpu_custom_call.1']
    %10 = vsyncpa [#allocation5], 0
    %11 = vsyncpa [#allocation3], 0
    %s12 = scalar_lea.sflag [#allocation3], 1
    %13 = vsyncpa %s12, 0
    %14 = vsyncpa [#allocation8], 0
    %s15 = scalar_lea.sflag [#allocation8], 1
    %16 = vsyncpa %s15, 0
    %17 = vsyncpa [#allocation4], 0
    %s18 = scalar_lea.sflag [#allocation4], 1
    %19 = vsyncpa %s18, 0
    %20 = vsyncpa [#allocation11], 0
    %s21 = scalar_lea.sflag [#allocation11], 1
    %22 = vsyncpa %s21, 0
    loop: start=0, step=1, limit=4
    $region2: #{tpu_custom_call.1} parent=1 // loop_pre_header
      _
    $region3: #{tpu_custom_call.1} parent=1 // loop_header
      %s24 = sphi 0, %s28
      %p25 = scmp.ge.s32.totalorder %s24, 4
      %s31 = sphi 0, %s43
      %s32 = sphi 0, %s39
      %s33 = sphi 0, %s31
      %s34 = sphi 0, %s32
      %s35 = sphi 0, %s33
      %s36 = sphi 0, %s34
      %s44 = sphi 0, %s44
      %s46 = sphi 0, %s44
      %s47 = sphi 0, %s46
      %s61 = sphi 0, %s47
      %s69 = sphi 0, %s71
      %s72 = sphi 0, %s69
      %s73 = sphi 0, %s72
      %s89 = sphi 0, %s73
      %s97 = sphi 0, %s99
      %s100 = sphi 0, %s97
      %s101 = sphi 0, %s100
      %s117 = sphi 0, %s101
      %s125 = sphi 0, %s127
      %s128 = sphi 0, %s125
      %s129 = sphi 0, %s128
      %s145 = sphi 0, %s129
      %s153 = sphi 0, %s155
      %s156 = sphi 0, %s153
      %s157 = sphi 0, %s156
      %s173 = sphi 0, %s157
    $region4: #{tpu_custom_call.1} parent=1 // loop_header_branch
      %27 = sbr.rel (%p25) target = $region8
    $region5: #{tpu_custom_call.1} parent=1 // loop_body
      %s29 = ssub.s32 %s24, 1
      %s30 = ssub.s32 %s24, 2
      %s37 = sadd.s32 1, %s32
      %p38 = scmp.ge.s32.totalorder %s37, 1
      %s39 = scalar_select %p38, 0, %s37
      %s40 = sadd.s32 1, %s31
      %s41 = scalar_select %p38, %s40, %s31
      %p42 = scmp.ge.s32.totalorder %s41, 2
      %s43 = scalar_select %p42, 0, %s41
      %s45 = sadd.s32 %s44, 1
      %p48 = scmp.eq.s32.totalorder %s24, 1
      %p49 = scmp.ne.s32.totalorder %s44, %s46
      %p50 = scmp.eq.s32.totalorder %s24, 0
      %p51 = por %p49, %p50
      %p52 = scmp.ne.s32.totalorder %s44, %s46
      %p53 = scmp.eq.s32.totalorder %s29, 1
      %p54 = por %p52, %p53
      %p55 = scmp.ne.s32.totalorder %s46, %s47
      %p56 = scmp.eq.s32.totalorder %s29, 0
      %p57 = por %p55, %p56
      %p58 = scmp.ne.s32.totalorder %s46, %s47
      %p59 = scmp.eq.s32.totalorder %s30, 1
      %p60 = por %p58, %p59
      %p62 = scmp.ne.s32.totalorder %s47, %s61
      %p63 = scmp.eq.s32.totalorder %s30, 0
      %p64 = por %p62, %p63
      %s65 = ssub.s32 %s31, %s43
      %s66 = ssub.s32 %s32, %s39
      %s67 = sor.u32 %s65, %s66
      %p68 = scmp.eq.s32.totalorder %s67, 0
      %s70 = sadd.s32 %s69, 1
      %s71 = scalar_select %p68, %s69, %s70
      %p74 = pneg %p68
      %p75 = scmp.eq.s32.totalorder %s24, 1
      %p76 = por %p74, %p75
      %p77 = scmp.ne.s32.totalorder %s69, %s72
      %p78 = scmp.eq.s32.totalorder %s24, 0
      %p79 = por %p77, %p78
      %p80 = scmp.ne.s32.totalorder %s69, %s72
      %p81 = scmp.eq.s32.totalorder %s29, 1
      %p82 = por %p80, %p81
      %p83 = scmp.ne.s32.totalorder %s72, %s73
      %p84 = scmp.eq.s32.totalorder %s29, 0
      %p85 = por %p83, %p84
      %p86 = scmp.ne.s32.totalorder %s72, %s73
      %p87 = scmp.eq.s32.totalorder %s30, 1
      %p88 = por %p86, %p87
      %p90 = scmp.ne.s32.totalorder %s73, %s89
      %p91 = scmp.eq.s32.totalorder %s30, 0
      %p92 = por %p90, %p91
      %s93 = ssub.s32 %s31, %s43
      %s94 = ssub.s32 %s32, %s39
      %s95 = sor.u32 %s93, %s94
      %p96 = scmp.eq.s32.totalorder %s95, 0
      %s98 = sadd.s32 %s97, 1
      %s99 = scalar_select %p96, %s97, %s98
      %p102 = pneg %p96
      %p103 = scmp.eq.s32.totalorder %s24, 1
      %p104 = por %p102, %p103
      %p105 = scmp.ne.s32.totalorder %s97, %s100
      %p106 = scmp.eq.s32.totalorder %s24, 0
      %p107 = por %p105, %p106
      %p108 = scmp.ne.s32.totalorder %s97, %s100
      %p109 = scmp.eq.s32.totalorder %s29, 1
      %p110 = por %p108, %p109
      %p111 = scmp.ne.s32.totalorder %s100, %s101
      %p112 = scmp.eq.s32.totalorder %s29, 0
      %p113 = por %p111, %p112
      %p114 = scmp.ne.s32.totalorder %s100, %s101
      %p115 = scmp.eq.s32.totalorder %s30, 1
      %p116 = por %p114, %p115
      %p118 = scmp.ne.s32.totalorder %s101, %s117
      %p119 = scmp.eq.s32.totalorder %s30, 0
      %p120 = por %p118, %p119
      %s121 = ssub.s32 %s31, %s43
      %s122 = ssub.s32 %s32, %s39
      %s123 = sor.u32 %s121, %s122
      %p124 = scmp.eq.s32.totalorder %s123, 0
      %s126 = sadd.s32 %s125, 1
      %s127 = scalar_select %p124, %s125, %s126
      %p130 = pneg %p124
      %p131 = scmp.eq.s32.totalorder %s24, 1
      %p132 = por %p130, %p131
      %p133 = scmp.ne.s32.totalorder %s125, %s128
      %p134 = scmp.eq.s32.totalorder %s24, 0
      %p135 = por %p133, %p134
      %p136 = scmp.ne.s32.totalorder %s125, %s128
      %p137 = scmp.eq.s32.totalorder %s29, 1
      %p138 = por %p136, %p137
      %p139 = scmp.ne.s32.totalorder %s128, %s129
      %p140 = scmp.eq.s32.totalorder %s29, 0
      %p141 = por %p139, %p140
      %p142 = scmp.ne.s32.totalorder %s128, %s129
      %p143 = scmp.eq.s32.totalorder %s30, 1
      %p144 = por %p142, %p143
      %p146 = scmp.ne.s32.totalorder %s129, %s145
      %p147 = scmp.eq.s32.totalorder %s30, 0
      %p148 = por %p146, %p147
      %s149 = ssub.s32 %s31, %s43
      %s150 = ssub.s32 %s32, %s39
      %s151 = sor.u32 %s149, %s150
      %p152 = scmp.eq.s32.totalorder %s151, 0
      %s154 = sadd.s32 %s153, 1
      %s155 = scalar_select %p152, %s153, %s154
      %p158 = pneg %p152
      %p159 = scmp.eq.s32.totalorder %s24, 1
      %p160 = por %p158, %p159
      %p161 = scmp.ne.s32.totalorder %s153, %s156
      %p162 = scmp.eq.s32.totalorder %s24, 0
      %p163 = por %p161, %p162
      %p164 = scmp.ne.s32.totalorder %s153, %s156
      %p165 = scmp.eq.s32.totalorder %s29, 1
      %p166 = por %p164, %p165
      %p167 = scmp.ne.s32.totalorder %s156, %s157
      %p168 = scmp.eq.s32.totalorder %s29, 0
      %p169 = por %p167, %p168
      %p170 = scmp.ne.s32.totalorder %s156, %s157
      %p171 = scmp.eq.s32.totalorder %s30, 1
      %p172 = por %p170, %p171
      %p174 = scmp.ne.s32.totalorder %s157, %s173
      %p175 = scmp.eq.s32.totalorder %s30, 0
      %p176 = por %p174, %p175
      %p177 = scmp.le.s32.totalorder 1, %s24
      %p178 = scmp.lt.s32.totalorder %s24, 3
      %p179 = pnand %p177, %p178
      %p180 = pneg %p179
      // Predicated region
      $region9: #{tpu_custom_call.1} parent=5 // pred_check
        _
      $region10: #{tpu_custom_call.1} parent=5 // pred_check_branch
        %182 = sbr.rel (%p179) target = $region12
      $region11: #{tpu_custom_call.1} parent=5 // pred_region
        %s183 = ssub.s32 %s24, 1
        // Predicated region
        $region13: #{tpu_custom_call.1} parent=11 // pred_check
          %p184 = pneg %p57
        $region14: #{tpu_custom_call.1} parent=11 // pred_check_branch
          %186 = sbr.rel (%p184) target = $region16
        $region15: #{tpu_custom_call.1} parent=11 // pred_region
          %s188 = ssub.s32 16, 16
          %189 = vsyncadd [#allocation5], %s188
          %192 = dma.hbm_to_smem %s0, 16, [#allocation2], [#allocation5]
        $region16: #{tpu_custom_call.1} parent=11 // pred_fallthru
          _
      $region12: #{tpu_custom_call.1} parent=5 // pred_fallthru
        _
      %p193 = scmp.lt.s32.totalorder %s24, 2
      // Predicated region
      $region17: #{tpu_custom_call.1} parent=5 // pred_check
        %p194 = pneg %p193
      $region18: #{tpu_custom_call.1} parent=5 // pred_check_branch
        %196 = sbr.rel (%p194) target = $region20
      $region19: #{tpu_custom_call.1} parent=5 // pred_region
        // Predicated region
        $region21: #{tpu_custom_call.1} parent=19 // pred_check
          %p197 = pneg %p79
        $region22: #{tpu_custom_call.1} parent=19 // pred_check_branch
          %199 = sbr.rel (%p197) target = $region24
        $region23: #{tpu_custom_call.1} parent=19 // pred_region
          %s200 = sand.u32 %s69, 1
          %s201 = scalar_lea.sflag [#allocation3], %s200
          %s202 = sand.u32 %s69, 1
          %s203 = smul.addr %s202, 32
          %s204 = scalar_lea.vmem [#allocation6], %s203
          %s206 = ssub.s32 512, 512
          %207 = vsyncadd %s201, %s206
          %s208 = smul.addr %s31, 4
          %s209 = sadd.s32 %s32, %s208
          %s210 = smul.addr %s209, 128
          %s211 = scalar_lea.hbm %s1, %s210
          %s212 = sshll.u32 %s204, 4
          %s213 = int_to_ptr.vmem [resolvable:$true] %s212
          %218 = dma.hbm_to_vmem [thread:$0]  %s211, 512, %s213, %s201, 128, 128, 8
        $region24: #{tpu_custom_call.1} parent=19 // pred_fallthru
          _
        // Predicated region
        $region25: #{tpu_custom_call.1} parent=19 // pred_check
          %p219 = pneg %p107
        $region26: #{tpu_custom_call.1} parent=19 // pred_check_branch
          %221 = sbr.rel (%p219) target = $region28
        $region27: #{tpu_custom_call.1} parent=19 // pred_region
          %s222 = sand.u32 %s97, 1
          %s223 = scalar_lea.sflag [#allocation8], %s222
          %s224 = sand.u32 %s97, 1
          %s225 = smul.addr %s224, 8
          %s226 = scalar_lea.vmem [#allocation7], %s225
          %s228 = ssub.s32 128, 128
          %229 = vsyncadd %s223, %s228
          %s230 = sadd.s32 %s32, %s31
          %s231 = smul.addr %s230, 128
          %s232 = scalar_lea.hbm %s2, %s231
          %s234 = sshll.u32 %s226, 4
          %s235 = int_to_ptr.vmem [resolvable:$true] %s234
          %237 = dma.hbm_to_vmem [thread:$0]  %s232, 128, %s235, %s223
        $region28: #{tpu_custom_call.1} parent=19 // pred_fallthru
          _
      $region20: #{tpu_custom_call.1} parent=5 // pred_fallthru
        _
      %p238 = scmp.le.s32.totalorder 1, %s24
      %p239 = scmp.lt.s32.totalorder %s24, 3
      %p240 = pnand %p238, %p239
      %p241 = pneg %p240
      // Predicated region
      $region29: #{tpu_custom_call.1} parent=5 // pred_check
        _
      $region30: #{tpu_custom_call.1} parent=5 // pred_check_branch
        %243 = sbr.rel (%p240) target = $region32
      $region31: #{tpu_custom_call.1} parent=5 // pred_region
        %s244 = ssub.s32 %s24, 1
        // Predicated region
        $region33: #{tpu_custom_call.1} parent=31 // pred_check
          %p245 = pneg %p57
        $region34: #{tpu_custom_call.1} parent=31 // pred_check_branch
          %247 = sbr.rel (%p245) target = $region36
        $region35: #{tpu_custom_call.1} parent=31 // pred_region
          %248 = dma.done [#allocation5], 16
        $region36: #{tpu_custom_call.1} parent=31 // pred_fallthru
          _
        %s249 = sand.u32 %s72, 1
        %s250 = scalar_lea.sflag [#allocation3], %s249
        %s251 = sand.u32 %s72, 1
        %s252 = smul.addr %s251, 32
        %s253 = scalar_lea.vmem [#allocation6], %s252
        // Predicated region
        $region37: #{tpu_custom_call.1} parent=31 // pred_check
          %p254 = pneg %p85
        $region38: #{tpu_custom_call.1} parent=31 // pred_check_branch
          %256 = sbr.rel (%p254) target = $region40
        $region39: #{tpu_custom_call.1} parent=31 // pred_region
          %257 = dma.done %s250, 512
        $region40: #{tpu_custom_call.1} parent=31 // pred_fallthru
          _
        %s258 = sand.u32 %s100, 1
        %s259 = scalar_lea.sflag [#allocation8], %s258
        %s260 = sand.u32 %s100, 1
        %s261 = smul.addr %s260, 8
        %s262 = scalar_lea.vmem [#allocation7], %s261
        // Predicated region
        $region41: #{tpu_custom_call.1} parent=31 // pred_check
          %p263 = pneg %p113
        $region42: #{tpu_custom_call.1} parent=31 // pred_check_branch
          %265 = sbr.rel (%p263) target = $region44
        $region43: #{tpu_custom_call.1} parent=31 // pred_region
          %266 = dma.done %s259, 128
        $region44: #{tpu_custom_call.1} parent=31 // pred_fallthru
          _
        %267 = sfence
        %p268 = pneg %p57
        %p269 = pneg %p54
        %s270 = sand.u32 %s72, 1
        %s271 = scalar_lea.sflag [#allocation3], %s270
        %s272 = sand.u32 %s72, 1
        %s273 = smul.addr %s272, 32
        %s274 = scalar_lea.vmem [#allocation6], %s273
        %p275 = pneg %p85
        %p276 = pneg %p82
        %s277 = sand.u32 %s100, 1
        %s278 = scalar_lea.sflag [#allocation8], %s277
        %s279 = sand.u32 %s100, 1
        %s280 = smul.addr %s279, 8
        %s281 = scalar_lea.vmem [#allocation7], %s280
        %p282 = pneg %p113
        %p283 = pneg %p110
        %p284 = pneg %p141
        %p285 = pneg %p138
        %s286 = sand.u32 %s128, 1
        %s287 = scalar_lea.sflag [#allocation4], %s286
        %s288 = sand.u32 %s128, 1
        %s289 = smul.addr %s288, 8
        %s290 = scalar_lea.vmem [#allocation9], %s289
        %p291 = pneg %p169
        %p292 = pneg %p166
        %s293 = sand.u32 %s156, 1
        %s294 = scalar_lea.sflag [#allocation11], %s293
        %s295 = sand.u32 %s156, 1
        %s296 = smul.addr %s295, 8
        %s297 = scalar_lea.vmem [#allocation10], %s296
        %v298 = vld [vmem:[%s262] sm:$0xff]
        %v299 = vld [vmem:[%s253] sm:$0xff]
        %s300 = scalar_lea.vmem %s253, 8 [#allocation6]
        %v301 = vld [vmem:[%s300] sm:$0xff]
        %s302 = scalar_lea.vmem %s253, 16 [#allocation6]
        %v303 = vld [vmem:[%s302] sm:$0xff]
        %s304 = scalar_lea.vmem %s253, 24 [#allocation6]
        %v305 = vld [vmem:[%s304] sm:$0xff]
        %v306 = vmax.f32 %v299, %v301
        %v307 = vmax.f32 %v306, %v303
        %v308 = vmax.f32 %v307, %v305
        %v309 = vsub.f32 %v299, %v308
        %v310 = vmul.f32 %v309, 1.442695
        %v311 = vpow.pop %v310
        %v312 = vadd.f32 %v311, 0.0
        %vm313 = vcmp.eq.s32.totalorder %v298, 0
        %v314 = vsel %vm313, %v299, 0.0
        %s315 = sld [smem:[#allocation2]]
        %v316 = vstv %s315
        %v317 = vsel %vm313, %v316, 0.0
        %v318 = vsub.f32 %v301, %v308
        %v319 = vmul.f32 %v318, 1.442695
        %v320 = vpow.pop %v319
        %v321 = vadd.f32 %v312, %v320
        %vm322 = vcmp.eq.s32.totalorder %v298, 1
        %v323 = vsel %vm322, %v301, %v314
        %s324 = sld [smem:[#allocation2 + $0x1]]
        %v325 = vstv %s324
        %v326 = vsel %vm322, %v325, %v317
        %v327 = vsub.f32 %v303, %v308
        %v328 = vmul.f32 %v327, 1.442695
        %v329 = vpow.pop %v328
        %v330 = vadd.f32 %v321, %v329
        %vm331 = vcmp.eq.s32.totalorder %v298, 2
        %v332 = vsel %vm331, %v303, %v323
        %s333 = sld [smem:[#allocation2 + $0x2]]
        %v334 = vstv %s333
        %v335 = vsel %vm331, %v334, %v326
        %v336 = vsub.f32 %v305, %v308
        %v337 = vmul.f32 %v336, 1.442695
        %v338 = vpow.pop %v337
        %v339 = vadd.f32 %v330, %v338
        %vm340 = vcmp.eq.s32.totalorder %v298, 3
        %v341 = vsel %vm340, %v305, %v332
        %s342 = sld [smem:[#allocation2 + $0x3]]
        %v343 = vstv %s342
        %v344 = vsel %vm340, %v343, %v335
        %v345 = vlog2.pop %v339
        %v346 = vmul.f32 %v345, 0.6931472
        %v347 = vadd.f32 %v308, %v346
        %v348 = vsub.f32 %v347, %v341
        %v349 = vmul.f32 %v344, %v348
        %v350 = vadd.f32 %v349, 0.0
        %351 = vst [vmem:[%s290] sm:$0xff] %v350
        %v352 = vadd.f32 %v344, 0.0
        %353 = vst [vmem:[%s297] sm:$0xff] %v352
        %s354 = sand.u32 %s128, 1
        %s355 = scalar_lea.sflag [#allocation4], %s354
        %s356 = sand.u32 %s128, 1
        %s357 = smul.addr %s356, 8
        %s358 = scalar_lea.vmem [#allocation9], %s357
        %s359 = sand.u32 %s156, 1
        %s360 = scalar_lea.sflag [#allocation11], %s359
        %s361 = sand.u32 %s156, 1
        %s362 = smul.addr %s361, 8
        %s363 = scalar_lea.vmem [#allocation10], %s362
        // Predicated region
        $region45: #{tpu_custom_call.1} parent=31 // pred_check
          %p364 = pneg %p138
        $region46: #{tpu_custom_call.1} parent=31 // pred_check_branch
          %366 = sbr.rel (%p364) target = $region48
        $region47: #{tpu_custom_call.1} parent=31 // pred_region
          %s368 = ssub.s32 128, 128
          %369 = vsyncadd %s355, %s368
          %s370 = sadd.s32 %s34, %s33
          %s371 = smul.addr %s370, 128
          %s372 = scalar_lea.hbm %s3, %s371
          %s374 = sshll.u32 %s358, 4
          %s375 = int_to_ptr.vmem [resolvable:$true] %s374
          %377 = dma.vmem_to_hbm [thread:$0]  %s375, 128, %s372, %s355
        $region48: #{tpu_custom_call.1} parent=31 // pred_fallthru
          _
        // Predicated region
        $region49: #{tpu_custom_call.1} parent=31 // pred_check
          %p378 = pneg %p166
        $region50: #{tpu_custom_call.1} parent=31 // pred_check_branch
          %380 = sbr.rel (%p378) target = $region52
        $region51: #{tpu_custom_call.1} parent=31 // pred_region
          %s382 = ssub.s32 128, 128
          %383 = vsyncadd %s360, %s382
          %s384 = sadd.s32 %s34, %s33
          %s385 = smul.addr %s384, 128
          %s386 = scalar_lea.hbm %s4, %s385
          %s388 = sshll.u32 %s363, 4
          %s389 = int_to_ptr.vmem [resolvable:$true] %s388
          %391 = dma.vmem_to_hbm [thread:$0]  %s389, 128, %s386, %s360
        $region52: #{tpu_custom_call.1} parent=31 // pred_fallthru
          _
      $region32: #{tpu_custom_call.1} parent=5 // pred_fallthru
        _
      %p392 = scmp.le.s32.totalorder 2, %s24
      // Predicated region
      $region53: #{tpu_custom_call.1} parent=5 // pred_check
        %p393 = pneg %p392
      $region54: #{tpu_custom_call.1} parent=5 // pred_check_branch
        %395 = sbr.rel (%p393) target = $region56
      $region55: #{tpu_custom_call.1} parent=5 // pred_region
        %s396 = ssub.s32 %s24, 2
        // Predicated region
        $region57: #{tpu_custom_call.1} parent=55 // pred_check
          %p397 = pneg %p144
        $region58: #{tpu_custom_call.1} parent=55 // pred_check_branch
          %399 = sbr.rel (%p397) target = $region60
        $region59: #{tpu_custom_call.1} parent=55 // pred_region
          %s400 = sand.u32 %s129, 1
          %s401 = scalar_lea.sflag [#allocation4], %s400
          %s402 = sand.u32 %s129, 1
          %s403 = smul.addr %s402, 8
          %s404 = scalar_lea.vmem [#allocation9], %s403
          %405 = dma.done %s401, 128
        $region60: #{tpu_custom_call.1} parent=55 // pred_fallthru
          _
        // Predicated region
        $region61: #{tpu_custom_call.1} parent=55 // pred_check
          %p406 = pneg %p172
        $region62: #{tpu_custom_call.1} parent=55 // pred_check_branch
          %408 = sbr.rel (%p406) target = $region64
        $region63: #{tpu_custom_call.1} parent=55 // pred_region
          %s409 = sand.u32 %s157, 1
          %s410 = scalar_lea.sflag [#allocation11], %s409
          %s411 = sand.u32 %s157, 1
          %s412 = smul.addr %s411, 8
          %s413 = scalar_lea.vmem [#allocation10], %s412
          %414 = dma.done %s410, 128
        $region64: #{tpu_custom_call.1} parent=55 // pred_fallthru
          _
      $region56: #{tpu_custom_call.1} parent=5 // pred_fallthru
        _
    $region6: #{tpu_custom_call.1} parent=1 // loop_footer
      %s28 = sadd.s32 1, %s24
    $region7: #{tpu_custom_call.1} parent=1 // loop_footer_branch
      %23 = sbr.rel target = $region3
    $region8: #{tpu_custom_call.1} parent=1 // loop_exit
      _
    %415 = vsyncpa [#allocation3], 1
    %s416 = scalar_lea.sflag [#allocation3], 1
    %417 = vsyncpa %s416, 1
    %418 = vsyncpa [#allocation8], 1
    %s419 = scalar_lea.sflag [#allocation8], 1
    %420 = vsyncpa %s419, 1
    %421 = vsyncpa [#allocation4], 1
    %s422 = scalar_lea.sflag [#allocation4], 1
    %423 = vsyncpa %s422, 1
    %424 = vsyncpa [#allocation11], 1
    %s425 = scalar_lea.sflag [#allocation11], 1
    %426 = vsyncpa %s425, 1
    %427 = vsyncpa [#allocation5], 1
    %s428 = scalar_lea.sflag [#allocation5], 1
    %429 = vsyncpa %s428, 1

</llo_original>
